<compile_context>
chip_gen: v5e
topology: v5e:2x2
jax: 0.10.0
libtpu: 0.0.40
codegen_flags: <defaults>
</compile_context>

<pallas_src>
import functools

import numpy as np
import jax
import jax.numpy as jnp
from jax import lax
from jax.experimental import pallas as pl
from jax.experimental.pallas import tpu as pltpu


_LANE = 128
_SUBLANE = 8
_MAX_TC = 512                 # cap on a channel block
_MAX_LANE_CHUNKS = 64         # cap on per-grid-step unrolled 128-lane chunks
_MAX_TL = _MAX_LANE_CHUNKS * _LANE


# ----------------------------------------------------------------------------
# chip-aware VMEM sizing
# ----------------------------------------------------------------------------
@functools.lru_cache(maxsize=1)
def _vmem_limits():
    """(scoped-VMEM limit to request, per-input-block byte budget).

    v5e/v6e have 128 MiB physical VMEM (16 / 32 MiB scoped defaults) so the
    limit can be raised; v7x only has 64 MiB per TensorCore so blocks stay
    smaller and the requested limit leaves headroom.  Double-buffered input
    (2 x budget) + f32 accumulator + outputs always fits the returned limit.
    """
    try:
        kind = jax.devices()[0].device_kind.lower()
    except Exception:  # pragma: no cover - defensive only
        kind = ""
    if "v6" in kind:                      # v6e
        return 96 * 1024 * 1024, 12 * 1024 * 1024
    if "7" in kind:                       # v7x (64 MiB physical per TC)
        return 48 * 1024 * 1024, 8 * 1024 * 1024
    if "v5" in kind:                      # v5e / v5 lite
        return 64 * 1024 * 1024, 8 * 1024 * 1024
    return 48 * 1024 * 1024, 6 * 1024 * 1024


# ----------------------------------------------------------------------------
# helpers
# ----------------------------------------------------------------------------
def _flatten_spatial(x):
    B, C = x.shape[0], x.shape[1]
    L = int(np.prod(x.shape[2:])) if x.ndim > 2 else 1
    return x.reshape(B, C, L), B, C, L


def _choose_pool_tiles(B, C, L, itemsize, budget):
    # ---- channel tile -----------------------------------------------------
    # A 128-aligned channel split keeps BOTH the (B, tc, tl) input block and
    # the (B, tc) output block legal under the (8, 128) BlockSpec rule and
    # gives the grid a real "parallel" axis (both TensorCores on v7x stream
    # their own channel blocks).  ~Neutral on 1-TC chips: tl grows to keep
    # the block at the same byte budget.
    if C % _LANE == 0 and C >= 2 * _LANE:
        tc = max(_LANE, min(_MAX_TC, (C // 2 // _LANE) * _LANE))
        # shrink (128 steps) if even a minimum-height (tl = 128) f32 block
        # would blow the budget at this batch size (large-B clamp fix)
        while tc > _LANE and B * tc * _LANE * 4 > budget:
            tc -= _LANE
    else:
        tc = C  # full-dim channel block (always a legal block shape)

    # ---- spatial tile -------------------------------------------------------
    max_l = budget // max(1, B * tc * itemsize)
    if L <= min(max(max_l, _LANE), _MAX_TL):
        tl = L                      # whole spatial extent in one block
    else:
        tl = max(_LANE, min((max_l // _LANE) * _LANE, _MAX_TL))
    return tc, tl


# ----------------------------------------------------------------------------
# Kernel 1: tiled global spatial average pooling  [B, C, L] -> [B, C]
# ----------------------------------------------------------------------------
def _pool_sum_kernel(x_ref, o_ref, acc_ref, *, L, tl):
    li = pl.program_id(1)
    n_l = pl.num_programs(1)
    inv_l = 1.0 / L

    # -- Path A: whole spatial extent fits in one block ----------------------
    if tl == L:
        # One cross-lane reduce per channel block; not in any hot loop.
        x = x_ref[...].astype(jnp.float32)
        o_ref[...] = jnp.sum(x, axis=-1) * inv_l
        return

    # -- Path B: many lane-aligned chunks (tl % 128 == 0 by construction) ----
    nch = tl // _LANE

    @pl.when(li == 0)
    def _():
        acc_ref[...] = jnp.zeros_like(acc_ref)

    def accumulate(masked):
        acc = acc_ref[...]
        if masked:
            rem = L - li * tl                                     # valid left
            lane = lax.broadcasted_iota(jnp.int32, (1, 1, _LANE), 2)
        for j in range(nch):                    # static unroll, nch <= 64
            chunk = x_ref[:, :, j * _LANE:(j + 1) * _LANE].astype(jnp.float32)
            if masked:
                # keep this mask: the OOB region of the last block is padding
                # garbage, NOT guaranteed zeros.
                chunk = jnp.where(lane + (j * _LANE) < rem, chunk, 0.0)
            acc = acc + chunk                   # pure VPU adds (no XLU)
        acc_ref[...] = acc

    if L % tl == 0:
        accumulate(masked=False)
    else:
        # pay the ragged-tail mask only on the LAST spatial block
        @pl.when(li < n_l - 1)
        def _():
            accumulate(masked=False)

        @pl.when(li == n_l - 1)
        def _():
            accumulate(masked=True)

    @pl.when(li == n_l - 1)
    def _():
        # single cross-lane (XLU) reduce per channel block, finalize only
        o_ref[...] = jnp.sum(acc_ref[...], axis=-1) * inv_l


def spatial_pool(features, *, block_budget_bytes=None):
    """Mimics CLIP._pool_features for 2D/3D/4D/5D inputs (standard path).

    TODO(synk): the voxel-encoder heuristic branch (3-D input with
    N_voxels > 10 * batch) of the PyTorch module is not implemented.
    """
    x = jnp.asarray(features)          # native dtype; cast to f32 in-kernel
    if x.ndim == 2:
        return x.astype(jnp.float32)
    x3, B, C, L = _flatten_spatial(x)

    vmem_limit, budget = _vmem_limits()
    if block_budget_bytes is not None:
        budget = int(block_budget_bytes)
    tc, tl = _choose_pool_tiles(B, C, L, x3.dtype.itemsize, budget)
    assert tl == L or tl % _LANE == 0

    grid = (pl.cdiv(C, tc), pl.cdiv(L, tl))
    kernel = functools.partial(_pool_sum_kernel, L=L, tl=tl)
    cost = pl.CostEstimate(
        flops=B * C * L,
        transcendentals=0,
        bytes_accessed=x3.size * x3.dtype.itemsize + B * C * 4,
    )
    # NOTE: when C % tc != 0 the last channel block reads out-of-bounds
    # channels into its accumulator rows; this is harmless because channel
    # rows never mix and the output write-back is clipped to the real [B, C]
    # extent.  Do not reuse the accumulator contents across channel blocks.
    # (If a profile shows exposed DMA, a pipeline_mode=pl.Buffered(3) sweep on
    # the input spec is the next cheap thing to try.)
    return pl.pallas_call(
        kernel,
        out_shape=jax.ShapeDtypeStruct((B, C), jnp.float32),
        grid=grid,
        in_specs=[pl.BlockSpec((B, tc, tl), lambda ci, li: (0, ci, li))],
        out_specs=pl.BlockSpec((B, tc), lambda ci, li: (0, ci)),
        scratch_shapes=[pltpu.VMEM((B, tc, _LANE), jnp.float32)],
        compiler_params=pltpu.CompilerParams(
            dimension_semantics=("parallel", "arbitrary"),
            vmem_limit_bytes=vmem_limit),
        cost_estimate=cost,
    )(x3)


# ----------------------------------------------------------------------------
# adaptive_avg_pool1d(D -> T) averaging matrix (PyTorch floor/ceil bins)
# ----------------------------------------------------------------------------
def adaptive_pool_matrix(L, T):
    """Exact F.adaptive_avg_pool1d averaging matrix."""
    P = np.zeros((L, T), dtype=np.float32)
    for j in range(T):
        start = (j * L) // T
        end = -(-((j + 1) * L) // T)          # ceil((j+1)*L / T)
        P[start:end, j] = 1.0 / (end - start)
    return jnp.asarray(P)


# ----------------------------------------------------------------------------
# Kernel 2: fused adaptive pool + L2 normalize + logits + InfoNCE CE
# ----------------------------------------------------------------------------
def _make_infonce_kernel(pool_t, pool_s):
    temperature = 0.07
    eps = 1e-12

    def kernel(*refs):
        it = iter(refs)
        t_ref = next(it)
        s_ref = next(it)
        pt_ref = next(it) if pool_t else None
        ps_ref = next(it) if pool_s else None
        loss_ref = next(it)

        t = t_ref[...].astype(jnp.float32)
        s = s_ref[...].astype(jnp.float32)
        # adaptive_avg_pool1d(D -> target_dim) as a matmul with the exact
        # floor/ceil bin-averaging matrix; the identity case is skipped
        # entirely (no eye() matmul).
        if pool_t:
            t = jnp.dot(t, pt_ref[...], preferred_element_type=jnp.float32)
        if pool_s:
            s = jnp.dot(s, ps_ref[...], preferred_element_type=jnp.float32)

        # F.normalize(x, dim=1): x / max(||x||, eps) == x*rsqrt(max(||x||^2, eps^2))
        t_inv = lax.rsqrt(jnp.maximum(jnp.sum(t * t, axis=1, keepdims=True),
                                      eps * eps))
        s_inv = lax.rsqrt(jnp.maximum(jnp.sum(s * s, axis=1, keepdims=True),
                                      eps * eps))
        t_norm = t * t_inv
        # fold 1/temperature into the student scale (no [B, B] divide)
        s_scaled = s * (s_inv * (1.0 / temperature))

        # logits = (s_norm @ t_norm.T) / temperature ; contract on last dims
        # so the MXU is fed directly (no XLU transpose of a VMEM tile).
        logits = lax.dot_general(
            s_scaled, t_norm,
            dimension_numbers=(((1,), (1,)), ((), ())),
            preferred_element_type=jnp.float32)
        B = logits.shape[0]

        # cross_entropy(logits, arange(B)), mean reduction (log-sum-exp form)
        m = jnp.max(logits, axis=1, keepdims=True)
        lse = m + jnp.log(jnp.sum(jnp.exp(logits - m), axis=1, keepdims=True))
        row = lax.broadcasted_iota(jnp.int32, (B, B), 0)
        col = lax.broadcasted_iota(jnp.int32, (B, B), 1)
        diag = jnp.sum(jnp.where(row == col, logits, 0.0), axis=1, keepdims=True)
        loss_ref[...] = jnp.sum(lse - diag, axis=0, keepdims=True) * (1.0 / B)

    return kernel


def infonce_loss(teacher_combined, student_combined):
    """Fused adaptive_avg_pool1d(min dim) + normalize + logits + CE."""
    t = teacher_combined.astype(jnp.float32)
    s = student_combined.astype(jnp.float32)
    B, Dt = t.shape
    _, Ds = s.shape
    T = min(Dt, Ds)
    pool_t = Dt > T
    pool_s = Ds > T

    # Everything here is tiny (B is a training batch, D a channel-count sum),
    # so a single-block kernel is cheapest: no extra launches, no HBM round
    # trip of the pooled [B, T] intermediate, no wrapper-side padding.  If the
    # pool matrices would not comfortably fit VMEM, apply them with XLA first.
    vmem_limit, _ = _vmem_limits()
    est = 4 * (B * Dt + B * Ds + B * B
               + (Dt * T if pool_t else 0) + (Ds * T if pool_s else 0))
    if 2 * est > vmem_limit // 2:
        if pool_t:
            t = t @ adaptive_pool_matrix(Dt, T); Dt = T; pool_t = False
        if pool_s:
            s = s @ adaptive_pool_matrix(Ds, T); Ds = T; pool_s = False

    args = [t, s]
    in_specs = [pl.BlockSpec((B, Dt), lambda i: (0, 0)),
                pl.BlockSpec((B, Ds), lambda i: (0, 0))]
    if pool_t:
        args.append(adaptive_pool_matrix(Dt, T))
        in_specs.append(pl.BlockSpec((Dt, T), lambda i: (0, 0)))
    if pool_s:
        args.append(adaptive_pool_matrix(Ds, T))
        in_specs.append(pl.BlockSpec((Ds, T), lambda i: (0, 0)))

    cost = pl.CostEstimate(
        flops=(2 * B * T * (Dt * int(pool_t) + Ds * int(pool_s))
               + 2 * B * B * T + 8 * B * T + 6 * B * B),
        transcendentals=B * B + 2 * B,
        bytes_accessed=est + 4,
    )
    out = pl.pallas_call(
        _make_infonce_kernel(pool_t, pool_s),
        out_shape=jax.ShapeDtypeStruct((1, 1), jnp.float32),
        grid=(1,),
        in_specs=in_specs,
        out_specs=pl.BlockSpec((1, 1), lambda i: (0, 0)),
        compiler_params=pltpu.CompilerParams(vmem_limit_bytes=vmem_limit),
        cost_estimate=cost,
    )(*args)
    return out[0, 0]


# ----------------------------------------------------------------------------
# CLIP forward (combined-only InfoNCE)
# ----------------------------------------------------------------------------
def clip_forward(teacher_features, student_features):
    # Parameter present in the PyTorch __init__ (unused in forward; fidelity only).
    logit_scale = jnp.float32(np.log(1.0 / 0.07))  # noqa: F841

    teacher_embeddings, student_embeddings, processed_levels = [], [], []
    # TODO(synk): if the level count is large, collapse the per-level pooling
    # calls into one PrefetchScalarGridSpec kernel driven by per-level
    # (C, L, offset) SMEM tables writing straight into the concatenated buffer.
    for level_name, t_feat in teacher_features.items():
        if level_name in student_features:
            s_feat = student_features[level_name]
            if t_feat is not None and s_feat is not None:
                teacher_embeddings.append(spatial_pool(t_feat))
                student_embeddings.append(spatial_pool(s_feat))
                processed_levels.append(level_name)

    if len(teacher_embeddings) < 2:
        return {"clip_total_loss": jnp.float32(0.0)}

    teacher_combined = jnp.concatenate(teacher_embeddings, axis=1)
    student_combined = jnp.concatenate(student_embeddings, axis=1)
    target_dim = min(teacher_combined.shape[1], student_combined.shape[1])

    loss = infonce_loss(teacher_combined, student_combined)
    return {
        "clip_total_loss": loss,
        "num_levels": len(processed_levels),
        "processed_levels": processed_levels,
        "embedding_dim": target_dim,
        "approach": "combined_only",
    }


# ----------------------------------------------------------------------------
# pure-JAX reference (correctness check in __main__)
# ----------------------------------------------------------------------------
def _reference_loss(teacher_features, student_features):
    def pool(x):
        x = jnp.asarray(x, jnp.float32)
        if x.ndim == 2:
            return x
        return jnp.mean(x.reshape(x.shape[0], x.shape[1], -1), axis=-1)

    tc = jnp.concatenate([pool(v) for v in teacher_features.values()], axis=1)
    sc = jnp.concatenate([pool(v) for v in student_features.values()], axis=1)
    T = min(tc.shape[1], sc.shape[1])

    def adpool(x):
        if x.shape[1] == T:
            return x
        return x @ adaptive_pool_matrix(x.shape[1], T)

    t = adpool(tc)
    s = adpool(sc)
    tn = t / jnp.maximum(jnp.linalg.norm(t, axis=1, keepdims=True), 1e-12)
    sn = s / jnp.maximum(jnp.linalg.norm(s, axis=1, keepdims=True), 1e-12)
    logits = (sn @ tn.T) / 0.07
    lse = jax.scipy.special.logsumexp(logits, axis=1)
    diag = jnp.diagonal(logits)
    return jnp.mean(lse - diag)


# ----------------------------------------------------------------------------
if __name__ == "__main__":
    key = jax.random.PRNGKey(0)
    k1, k2, k3, k4, k5, k6 = jax.random.split(key, 6)

    B = 4
    # teacher feature maps (NCHW), two levels -> combined dim 16 + 24 = 40
    teacher_features = {
        "backbone": jax.random.normal(k1, (B, 16, 8, 8), dtype=jnp.float32),
        "neck": jax.random.normal(k2, (B, 24, 8, 8), dtype=jnp.float32),
    }
    # student feature maps (NCHW), two levels -> combined dim 8 + 12 = 20
    student_features = {
        "backbone": jax.random.normal(k3, (B, 8, 8, 8), dtype=jnp.float32),
        "neck": jax.random.normal(k4, (B, 12, 8, 8), dtype=jnp.float32),
    }

    # --- self-test: multi-chunk + ragged-tail pooling path (f32) -------------
    xt = jax.random.normal(k5, (2, 8, 300), dtype=jnp.float32)
    got = jax.block_until_ready(spatial_pool(xt, block_budget_bytes=8192))
    np.testing.assert_allclose(np.asarray(got),
                               np.asarray(jnp.mean(xt, axis=-1)),
                               rtol=1e-5, atol=1e-5)

    # --- self-test: multi-chunk + ragged-tail pooling path (bf16 input) ------
    xb = jax.random.normal(k6, (2, 16, 5, 37), dtype=jnp.bfloat16)
    got_b = jax.block_until_ready(spatial_pool(xb, block_budget_bytes=4096))
    ref_b = jnp.mean(xb.astype(jnp.float32).reshape(2, 16, -1), axis=-1)
    np.testing.assert_allclose(np.asarray(got_b), np.asarray(ref_b),
                               rtol=1e-3, atol=1e-3)

    # --- full forward ---------------------------------------------------------
    out = clip_forward(teacher_features, student_features)
    loss = jax.block_until_ready(out["clip_total_loss"])
    assert jnp.isfinite(loss)

    ref = _reference_loss(teacher_features, student_features)
    np.testing.assert_allclose(np.asarray(loss), np.asarray(ref),
                               rtol=1e-3, atol=1e-3)
    print("KERNEL_OK")
</pallas_src>

<mosaic_0001>
module attributes {stable_mosaic.version = 11 : i64} {
  func.func @_pool_sum_kernel(%arg0: i32, %arg1: i32, %arg2: memref<2x8x128xf32, #tpu.memory_space<vmem>>, %arg3: memref<2x8xf32, #tpu.memory_space<vmem>>, %arg4: memref<2x8x128xf32, #tpu.memory_space<vmem>>) attributes {dimension_semantics = [#tpu.dimension_semantics<parallel>, #tpu.dimension_semantics<arbitrary>], iteration_bounds = array<i64: 1, 3>, scalar_prefetch = 0 : i64, scratch_operands = 1 : i64, tpu.core_type = #tpu.core_type<tc>, window_params = [{transform_indices = @transform_0, window_bounds = array<i64: 2, 8, 128>}, {transform_indices = @transform_1, window_bounds = array<i64: 2, 8>}]} {
    %c0_i32 = arith.constant 0 : i32
    %0 = arith.cmpi eq, %arg1, %c0_i32 : i32
    %1 = arith.extui %0 : i1 to i32
    %c0_i32_0 = arith.constant 0 : i32
    %2 = arith.cmpi ne, %1, %c0_i32_0 : i32
    scf.if %2 {
      %cst = arith.constant 0.000000e+00 : f32
      %12 = vector.broadcast %cst : f32 to vector<2x8x128xf32>
      %c0 = arith.constant 0 : index
      %c0_6 = arith.constant 0 : index
      %c0_7 = arith.constant 0 : index
      %13 = vector.load %arg4[%c0, %c0_6, %c0_7] : memref<2x8x128xf32, #tpu.memory_space<vmem>>, vector<2x8x128xf32>
      tpu.vector_store %arg4[%c0, %c0_6, %c0_7], %12 {strides = array<i32>} : memref<2x8x128xf32, #tpu.memory_space<vmem>>, vector<2x8x128xf32>,
    } else {
    }
    %c2_i32 = arith.constant 2 : i32
    %3 = arith.cmpi slt, %arg1, %c2_i32 : i32
    %4 = arith.extui %3 : i1 to i32
    %c0_i32_1 = arith.constant 0 : i32
    %5 = arith.cmpi ne, %4, %c0_i32_1 : i32
    scf.if %5 {
      %c0 = arith.constant 0 : index
      %c0_6 = arith.constant 0 : index
      %c0_7 = arith.constant 0 : index
      %12 = vector.load %arg4[%c0, %c0_6, %c0_7] : memref<2x8x128xf32, #tpu.memory_space<vmem>>, vector<2x8x128xf32>
      %c0_8 = arith.constant 0 : index
      %c0_9 = arith.constant 0 : index
      %c0_10 = arith.constant 0 : index
      %13 = vector.load %arg2[%c0_8, %c0_9, %c0_10] : memref<2x8x128xf32, #tpu.memory_space<vmem>>, vector<2x8x128xf32>
      %14 = arith.addf %12, %13 : vector<2x8x128xf32>
      %c0_11 = arith.constant 0 : index
      %c0_12 = arith.constant 0 : index
      %c0_13 = arith.constant 0 : index
      %15 = vector.load %arg4[%c0_11, %c0_12, %c0_13] : memref<2x8x128xf32, #tpu.memory_space<vmem>>, vector<2x8x128xf32>
      tpu.vector_store %arg4[%c0_11, %c0_12, %c0_13], %14 {strides = array<i32>} : memref<2x8x128xf32, #tpu.memory_space<vmem>>, vector<2x8x128xf32>,
    } else {
    }
    %c2_i32_2 = arith.constant 2 : i32
    %6 = arith.cmpi eq, %arg1, %c2_i32_2 : i32
    %7 = arith.extui %6 : i1 to i32
    %c0_i32_3 = arith.constant 0 : i32
    %8 = arith.cmpi ne, %7, %c0_i32_3 : i32
    scf.if %8 {
      %c0 = arith.constant 0 : index
      %c0_6 = arith.constant 0 : index
      %c0_7 = arith.constant 0 : index
      %12 = vector.load %arg4[%c0, %c0_6, %c0_7] : memref<2x8x128xf32, #tpu.memory_space<vmem>>, vector<2x8x128xf32>
      %c128_i32 = arith.constant 128 : i32
      %13 = arith.muli %arg1, %c128_i32 : i32
      %c300_i32 = arith.constant 300 : i32
      %14 = arith.subi %c300_i32, %13 : i32
      %15 = tpu.iota {dimensions = array<i32: 2>} : vector<1x1x128xi32>
      %c0_8 = arith.constant 0 : index
      %c0_9 = arith.constant 0 : index
      %c0_10 = arith.constant 0 : index
      %16 = vector.load %arg2[%c0_8, %c0_9, %c0_10] : memref<2x8x128xf32, #tpu.memory_space<vmem>>, vector<2x8x128xf32>
      %c0_i32_11 = arith.constant 0 : i32
      %17 = vector.broadcast %c0_i32_11 : i32 to vector<1x1x128xi32>
      %18 = arith.addi %15, %17 : vector<1x1x128xi32>
      %19 = vector.broadcast %14 : i32 to vector<1x1x128xi32>
      %20 = arith.cmpi slt, %18, %19 : vector<1x1x128xi32>
      %cst = arith.constant 0.000000e+00 : f32
      %21 = vector.shape_cast %20 : vector<1x1x128xi1> to vector<1x1x128xi1>
      %22 = vector.broadcast %21 : vector<1x1x128xi1> to vector<2x8x128xi1>
      %23 = vector.broadcast %cst : f32 to vector<2x8x128xf32>
      %24 = arith.select %22, %16, %23 : vector<2x8x128xi1>, vector<2x8x128xf32>
      %25 = arith.addf %12, %24 : vector<2x8x128xf32>
      %c0_12 = arith.constant 0 : index
      %c0_13 = arith.constant 0 : index
      %c0_14 = arith.constant 0 : index
      %26 = vector.load %arg4[%c0_12, %c0_13, %c0_14] : memref<2x8x128xf32, #tpu.memory_space<vmem>>, vector<2x8x128xf32>
      tpu.vector_store %arg4[%c0_12, %c0_13, %c0_14], %25 {strides = array<i32>} : memref<2x8x128xf32, #tpu.memory_space<vmem>>, vector<2x8x128xf32>,
    } else {
    }
    %c2_i32_4 = arith.constant 2 : i32
    %9 = arith.cmpi eq, %arg1, %c2_i32_4 : i32
    %10 = arith.extui %9 : i1 to i32
    %c0_i32_5 = arith.constant 0 : i32
    %11 = arith.cmpi ne, %10, %c0_i32_5 : i32
    scf.if %11 {
      %c0 = arith.constant 0 : index
      %c0_6 = arith.constant 0 : index
      %c0_7 = arith.constant 0 : index
      %12 = vector.load %arg4[%c0, %c0_6, %c0_7] : memref<2x8x128xf32, #tpu.memory_space<vmem>>, vector<2x8x128xf32>
      %cst = arith.constant dense<0.000000e+00> : vector<2x8xf32>
      %13 = vector.multi_reduction <add>, %12, %cst [2] : vector<2x8x128xf32> to vector<2x8xf32>
      %cst_8 = arith.constant 0.00333333341 : f32
      %14 = vector.broadcast %cst_8 : f32 to vector<2x8xf32>
      %15 = arith.mulf %13, %14 : vector<2x8xf32>
      %c0_9 = arith.constant 0 : index
      %c0_10 = arith.constant 0 : index
      %16 = vector.load %arg3[%c0_9, %c0_10] : memref<2x8xf32, #tpu.memory_space<vmem>>, vector<2x8xf32>
      tpu.vector_store %arg3[%c0_9, %c0_10], %15 {strides = array<i32>} : memref<2x8xf32, #tpu.memory_space<vmem>>, vector<2x8xf32>,
    } else {
    }
    return
  }
  func.func @transform_0(%arg0: i32, %arg1: i32) -> (i32, i32, i32) {
    %c0_i32 = arith.constant 0 : i32
    %c0_i32_0 = arith.constant 0 : i32
    return %c0_i32, %arg0, %arg1 : i32, i32, i32
  }
  func.func @transform_1(%arg0: i32, %arg1: i32) -> (i32, i32) {
    %c0_i32 = arith.constant 0 : i32
    %c0_i32_0 = arith.constant 0 : i32
    return %c0_i32, %arg0 : i32, i32
  }
}

</mosaic_0001>

<llo_original>
// kernel: tpu_custom_call.1
$region0: #{tpu_custom_call.1}
  #allocation0 [shape = 'u32[]', space=smem, size = 0x4, offset = 0x4, fixed_abs, tag = 'smem constant byte address 0x4 - core index']
  #allocation1 [shape = 'u32[72,128]{1,0:T(1,128)}', space=vmem, size = 0x9000, scoped, tag = 'internal scratch']
  #allocation2 [shape = 'f32[2,8,128]{2,1,0:T(8,128)}', space=vmem, size = 0x2000, scoped, tag = 'scratch operand']
  %s0 = inlined_call_operand.hbm [shape: f32[2,8,300], index: 0, kind: input, shape index: {}]
  %s1 = inlined_call_operand.hbm [shape: f32[2,8], index: 1, kind: output, shape index: {}]
  %s2 = sld [smem:[#allocation0]]
  $region53: #{tpu_custom_call.1} parent=0
    _
  %s4 = ssub.s32 1, %s2
  %s5 = scalar_select 0, %s4, %s2
  $region1: #{tpu_custom_call.1} parent=0
    #allocation3 [shape = 'u8[16384]{0}', space=vmem, size = 0x4000, scoped, tag = 'input window, operand 0']
    #allocation4 [shape = 's32[2]{0}', space=sflag, size = 0x8, scoped, tag = 'scoped memory for tpu_custom_call.1']
    #allocation5 [shape = 's32[2]{0}', space=sflag, size = 0x8, scoped, tag = 'scoped memory for tpu_custom_call.1']
    #allocation6 [shape = 'u8[1024]{0}', space=vmem, size = 0x400, scoped, tag = 'output window, operand 0, single buffered']
    %6 = vsyncpa [#allocation4], 0
    %s7 = scalar_lea.sflag [#allocation4], 1
    %8 = vsyncpa %s7, 0
    %9 = vsyncpa [#allocation5], 0
    loop: start=0, step=1, limit=5
    $region2: #{tpu_custom_call.1} parent=1 // loop_pre_header
      _
    $region3: #{tpu_custom_call.1} parent=1 // loop_header
      %s11 = sphi 0, %s15
      %p12 = scmp.ge.s32.totalorder %s11, 5
      %s18 = sphi 0, %s30
      %s19 = sphi 0, %s26
      %s20 = sphi 0, %s18
      %s21 = sphi 0, %s19
      %s22 = sphi 0, %s20
      %s23 = sphi 0, %s21
      %s35 = sphi 0, %s37
      %s38 = sphi 0, %s35
      %s39 = sphi 0, %s38
      %s55 = sphi 0, %s39
      %s61 = sphi 0, %s63
      %s64 = sphi 0, %s61
      %s65 = sphi 0, %s64
      %s81 = sphi 0, %s65
    $region4: #{tpu_custom_call.1} parent=1 // loop_header_branch
      %14 = sbr.rel (%p12) target = $region8
    $region5: #{tpu_custom_call.1} parent=1 // loop_body
      %s16 = ssub.s32 %s11, 1
      %s17 = ssub.s32 %s11, 2
      %s24 = sadd.s32 1, %s19
      %p25 = scmp.ge.s32.totalorder %s24, 3
      %s26 = scalar_select %p25, 0, %s24
      %s27 = sadd.s32 1, %s18
      %s28 = scalar_select %p25, %s27, %s18
      %p29 = scmp.ge.s32.totalorder %s28, 1
      %s30 = scalar_select %p29, 0, %s28
      %s31 = ssub.s32 %s18, %s30
      %s32 = ssub.s32 %s19, %s26
      %s33 = sor.u32 %s31, %s32
      %p34 = scmp.eq.s32.totalorder %s33, 0
      %s36 = sadd.s32 %s35, 1
      %s37 = scalar_select %p34, %s35, %s36
      %p40 = pneg %p34
      %p41 = scmp.eq.s32.totalorder %s11, 2
      %p42 = por %p40, %p41
      %p43 = scmp.ne.s32.totalorder %s35, %s38
      %p44 = scmp.eq.s32.totalorder %s11, 0
      %p45 = por %p43, %p44
      %p46 = scmp.ne.s32.totalorder %s35, %s38
      %p47 = scmp.eq.s32.totalorder %s16, 2
      %p48 = por %p46, %p47
      %p49 = scmp.ne.s32.totalorder %s38, %s39
      %p50 = scmp.eq.s32.totalorder %s16, 0
      %p51 = por %p49, %p50
      %p52 = scmp.ne.s32.totalorder %s38, %s39
      %p53 = scmp.eq.s32.totalorder %s17, 2
      %p54 = por %p52, %p53
      %p56 = scmp.ne.s32.totalorder %s39, %s55
      %p57 = scmp.eq.s32.totalorder %s17, 0
      %p58 = por %p56, %p57
      %s59 = ssub.s32 %s18, %s30
      %p60 = scmp.eq.s32.totalorder %s59, 0
      %s62 = sadd.s32 %s61, 1
      %s63 = scalar_select %p60, %s61, %s62
      %p66 = pneg %p60
      %p67 = scmp.eq.s32.totalorder %s11, 2
      %p68 = por %p66, %p67
      %p69 = scmp.ne.s32.totalorder %s61, %s64
      %p70 = scmp.eq.s32.totalorder %s11, 0
      %p71 = por %p69, %p70
      %p72 = scmp.ne.s32.totalorder %s61, %s64
      %p73 = scmp.eq.s32.totalorder %s16, 2
      %p74 = por %p72, %p73
      %p75 = scmp.ne.s32.totalorder %s64, %s65
      %p76 = scmp.eq.s32.totalorder %s16, 0
      %p77 = por %p75, %p76
      %p78 = scmp.ne.s32.totalorder %s64, %s65
      %p79 = scmp.eq.s32.totalorder %s17, 2
      %p80 = por %p78, %p79
      %p82 = scmp.ne.s32.totalorder %s65, %s81
      %p83 = scmp.eq.s32.totalorder %s17, 0
      %p84 = por %p82, %p83
      %p85 = scmp.le.s32.totalorder 1, %s11
      %p86 = scmp.lt.s32.totalorder %s11, 4
      %p87 = pnand %p85, %p86
      %p88 = pneg %p87
      // Predicated region
      $region9: #{tpu_custom_call.1} parent=5 // pred_check
        _
      $region10: #{tpu_custom_call.1} parent=5 // pred_check_branch
        %90 = sbr.rel (%p87) target = $region12
      $region11: #{tpu_custom_call.1} parent=5 // pred_region
        %s91 = ssub.s32 %s11, 1
      $region12: #{tpu_custom_call.1} parent=5 // pred_fallthru
        _
      %p92 = scmp.lt.s32.totalorder %s11, 3
      // Predicated region
      $region13: #{tpu_custom_call.1} parent=5 // pred_check
        %p93 = pneg %p92
      $region14: #{tpu_custom_call.1} parent=5 // pred_check_branch
        %95 = sbr.rel (%p93) target = $region16
      $region15: #{tpu_custom_call.1} parent=5 // pred_region
        // Predicated region
        $region17: #{tpu_custom_call.1} parent=15 // pred_check
          %p96 = pneg %p45
        $region18: #{tpu_custom_call.1} parent=15 // pred_check_branch
          %98 = sbr.rel (%p96) target = $region20
        $region19: #{tpu_custom_call.1} parent=15 // pred_region
          %s99 = sand.u32 %s35, 1
          %s100 = scalar_lea.sflag [#allocation4], %s99
          %s101 = sand.u32 %s35, 1
          %s102 = smul.addr %s101, 16
          %s103 = scalar_lea.vmem [#allocation3], %s102
          %105 = vsyncadd %s100, 0
          %s106 = smul.addr %s18, 3
          %s107 = sadd.s32 %s19, %s106
          %s108 = smul.addr %s107, 8
          %s109 = scalar_lea.hbm %s0, %s108
          %s110 = sshll.u32 %s109, 4
          %s111 = int_to_ptr.hbm [resolvable:$true] %s110
          %s112 = sshll.u32 %s103, 4
          %s113 = int_to_ptr.vmem [resolvable:$true] %s112
          %118 = dma.hbm_to_vmem [thread:$0]  %s111, 256, %s113, %s100, 384, 128, 8
        $region20: #{tpu_custom_call.1} parent=15 // pred_fallthru
          _
      $region16: #{tpu_custom_call.1} parent=5 // pred_fallthru
        _
      %p119 = scmp.le.s32.totalorder 1, %s11
      %p120 = scmp.lt.s32.totalorder %s11, 4
      %p121 = pnand %p119, %p120
      %p122 = pneg %p121
      // Predicated region
      $region21: #{tpu_custom_call.1} parent=5 // pred_check
        _
      $region22: #{tpu_custom_call.1} parent=5 // pred_check_branch
        %124 = sbr.rel (%p121) target = $region24
      $region23: #{tpu_custom_call.1} parent=5 // pred_region
        %s125 = ssub.s32 %s11, 1
        %s126 = sand.u32 %s38, 1
        %s127 = scalar_lea.sflag [#allocation4], %s126
        %s128 = sand.u32 %s38, 1
        %s129 = smul.addr %s128, 16
        %s130 = scalar_lea.vmem [#allocation3], %s129
        // Predicated region
        $region25: #{tpu_custom_call.1} parent=23 // pred_check
          %p131 = pneg %p51
        $region26: #{tpu_custom_call.1} parent=23 // pred_check_branch
          %133 = sbr.rel (%p131) target = $region28
        $region27: #{tpu_custom_call.1} parent=23 // pred_region
          %135 = dma.done %s127, 256
        $region28: #{tpu_custom_call.1} parent=23 // pred_fallthru
          _
        %s136 = sand.u32 %s38, 1
        %s137 = scalar_lea.sflag [#allocation4], %s136
        %s138 = sand.u32 %s38, 1
        %s139 = smul.addr %s138, 16
        %s140 = scalar_lea.vmem [#allocation3], %s139
        %p141 = pneg %p51
        %p142 = pneg %p48
        %p143 = pneg %p77
        %p144 = pneg %p74
        %p145 = scmp.eq.s32.totalorder %s21, 0
        // Predicated region
        $region29: #{tpu_custom_call.1} parent=23 // pred_check
          %p146 = pneg %p145
        $region30: #{tpu_custom_call.1} parent=23 // pred_check_branch
          %148 = sbr.rel (%p146) target = $region32
        $region31: #{tpu_custom_call.1} parent=23 // pred_region
          %149 = vst [vmem:[#allocation2] sm:$0xff] 0.0
          %150 = vst [vmem:[#allocation2 + $0x8] sm:$0xff] 0.0
        $region32: #{tpu_custom_call.1} parent=23 // pred_fallthru
          _
        %p151 = scmp.lt.s32.totalorder %s21, 2
        // Predicated region
        $region33: #{tpu_custom_call.1} parent=23 // pred_check
          %p152 = pneg %p151
        $region34: #{tpu_custom_call.1} parent=23 // pred_check_branch
          %154 = sbr.rel (%p152) target = $region36
        $region35: #{tpu_custom_call.1} parent=23 // pred_region
          %v155 = vld [vmem:[#allocation2] sm:$0xff]
          %v156 = vld [vmem:[#allocation2 + $0x8] sm:$0xff]
          %v157 = vld [vmem:[%s130] sm:$0xff]
          %v158 = vld [vmem:[%s130 + $0x8] sm:$0xff]
          %v159 = vadd.f32 %v155, %v157
          %v160 = vadd.f32 %v156, %v158
          %161 = vst [vmem:[#allocation2] sm:$0xff] %v159
          %162 = vst [vmem:[#allocation2 + $0x8] sm:$0xff] %v160
        $region36: #{tpu_custom_call.1} parent=23 // pred_fallthru
          _
        %p163 = scmp.eq.s32.totalorder %s21, 2
        // Predicated region
        $region37: #{tpu_custom_call.1} parent=23 // pred_check
          %p164 = pneg %p163
        $region38: #{tpu_custom_call.1} parent=23 // pred_check_branch
          %166 = sbr.rel (%p164) target = $region40
        $region39: #{tpu_custom_call.1} parent=23 // pred_region
          %v167 = vld [vmem:[#allocation2] sm:$0xff]
          %v168 = vld [vmem:[#allocation2 + $0x8] sm:$0xff]
          %s169 = smul.u32 %s21, 128
          %s170 = ssub.s32 300, %s169
          %v171 = vlaneseq
          %v172 = vand.u32 %v171, 127
          %v173 = vld [vmem:[%s130] sm:$0xff]
          %v174 = vld [vmem:[%s130 + $0x8] sm:$0xff]
          %v175 = vstv %s170
          %vm176 = vcmp.lt.s32.totalorder %v172, %v175
          %v177 = vsel %vm176, 1, 0
          %vm178 = vcmp.eq.s32.totalorder %v177, 1
          %v179 = vsel %vm178, %v173, 0.0
          %v180 = vsel %vm178, %v174, 0.0
          %v181 = vadd.f32 %v167, %v179
          %v182 = vadd.f32 %v168, %v180
          %183 = vst [vmem:[#allocation2] sm:$0xff] %v181
          %184 = vst [vmem:[#allocation2 + $0x8] sm:$0xff] %v182
          %v185 = vld [vmem:[#allocation2] sm:$0xff]
          %v186 = vld [vmem:[#allocation2 + $0x8] sm:$0xff]
          %187 = vadd.xlane.f32.xlu0 %v185
          %v188 = vpop.xlane.xlu0 %187
          %189 = vadd.xlane.f32.xlu0 %v186
          %v190 = vpop.xlane.xlu0 %189
          %v191 = vmul.f32 %v188, 0.0033333334
          %v192 = vmul.f32 %v190, 0.0033333334
          %v195 = vperm.slane %v191, %v172
          %v196 = vperm.slane %v192, %v172
          %vm197 = vcmask 1041409
          %v198 = vsel %vm197, %v196, %v195
          %vm200 = vcmask 58368
          %201 = vst.msk [vmem:[#allocation6] sm:$0x3] %vm200, %v198
        $region40: #{tpu_custom_call.1} parent=23 // pred_fallthru
          _
        // Predicated region
        $region41: #{tpu_custom_call.1} parent=23 // pred_check
          %p202 = pneg %p74
        $region42: #{tpu_custom_call.1} parent=23 // pred_check_branch
          %204 = sbr.rel (%p202) target = $region44
        $region43: #{tpu_custom_call.1} parent=23 // pred_region
          %206 = vsyncadd [#allocation5], 0
          %s207 = smul.addr %s20, 2
          %s208 = scalar_lea.hbm %s1, %s207
          %s210 = sshll.u32 [#allocation6], 4
          %s211 = int_to_ptr.vmem [resolvable:$true] %s210
          %s212 = sshll.u32 %s208, 4
          %s213 = int_to_ptr.hbm [resolvable:$true] %s212
          %215 = dma.vmem_to_hbm [thread:$0]  %s211, 32, %s213, [#allocation5]
        $region44: #{tpu_custom_call.1} parent=23 // pred_fallthru
          _
        // Predicated region
        $region45: #{tpu_custom_call.1} parent=23 // pred_check
          %p216 = pneg %p74
        $region46: #{tpu_custom_call.1} parent=23 // pred_check_branch
          %218 = sbr.rel (%p216) target = $region48
        $region47: #{tpu_custom_call.1} parent=23 // pred_region
          %220 = dma.done [#allocation5], 32
        $region48: #{tpu_custom_call.1} parent=23 // pred_fallthru
          _
      $region24: #{tpu_custom_call.1} parent=5 // pred_fallthru
        _
      %p221 = scmp.le.s32.totalorder 2, %s11
      // Predicated region
      $region49: #{tpu_custom_call.1} parent=5 // pred_check
        %p222 = pneg %p221
      $region50: #{tpu_custom_call.1} parent=5 // pred_check_branch
        %224 = sbr.rel (%p222) target = $region52
      $region51: #{tpu_custom_call.1} parent=5 // pred_region
        %s225 = ssub.s32 %s11, 2
      $region52: #{tpu_custom_call.1} parent=5 // pred_fallthru
        _
    $region6: #{tpu_custom_call.1} parent=1 // loop_footer
      %s15 = sadd.s32 1, %s11
    $region7: #{tpu_custom_call.1} parent=1 // loop_footer_branch
      %10 = sbr.rel target = $region3
    $region8: #{tpu_custom_call.1} parent=1 // loop_exit
      _
    %226 = vsyncpa [#allocation4], 1
    %s227 = scalar_lea.sflag [#allocation4], 1
    %228 = vsyncpa %s227, 1
    %229 = vsyncpa [#allocation5], 1
    %s230 = scalar_lea.sflag [#allocation5], 1
    %231 = vsyncpa %s230, 1

</llo_original>
